<compile_context>
chip_gen: v7x
topology: tpu7x:2x2x1
jax: 0.10.0
libtpu: 0.0.40
codegen_flags: <defaults>
</compile_context>

<pallas_src>
import jax
import jax.numpy as jnp
from jax import lax
from jax.experimental import pallas as pl
from jax.experimental.pallas import tpu as pltpu


def _round_up(x, m):
    return (x + m - 1) // m * m


# ---------------------------------------------------------------------------
# Static layout of the packed weight / bias buffers
# ---------------------------------------------------------------------------

def _build_layout(input_size, num_channels, kernel_size, output_size):
    K = kernel_size
    w_rows = 0
    b_rows = 0

    def add_w(nrows):
        nonlocal w_rows
        off = w_rows
        w_rows += _round_up(nrows, 16)        # keep chunks bf16 sublane-tile aligned
        return off

    def add_b():
        nonlocal b_rows
        off = b_rows
        b_rows += 1
        return off

    blocks = []
    in_c = input_size
    for i, out_c in enumerate(num_channels):
        blk = {
            "d": 2 ** i, "cin": in_c, "cout": out_c,
            "w1": add_w(K * in_c), "b1": add_b(),
            "w2": add_w(K * out_c), "b2": add_b(),
            "down": None,
        }
        if in_c != out_c:                      # 1x1 downsample on the residual path
            blk["down"] = (add_w(in_c), add_b())
        blocks.append(blk)
        in_c = out_c

    H = output_size + 1                        # decoder + decoder2 fused
    head = {"c": in_c, "h": H, "w": add_w(in_c), "b": add_b()}

    c_pad = _round_up(max([b["cout"] for b in blocks] + [H]), 128)
    return {
        "K": K, "blocks": blocks, "head": head,
        "c_pad": c_pad,
        "w_rows": _round_up(max(w_rows, 16), 16),
        "b_rows": _round_up(max(b_rows, 8), 8),
    }


# ---------------------------------------------------------------------------
# Parameter construction (deterministic, synthetic) + packing
# ---------------------------------------------------------------------------

def init_tcn_params(key, input_size, num_channels, kernel_size, output_size):
    """Returns (wpack_bf16, bpack_f32, layout, raw_f32_params_for_reference)."""
    layout = _build_layout(input_size, num_channels, kernel_size, output_size)
    K = kernel_size
    wpack = jnp.zeros((layout["w_rows"], layout["c_pad"]), jnp.float32)
    bpack = jnp.zeros((layout["b_rows"], layout["c_pad"]), jnp.float32)
    raw_blocks = []

    def wnorm(v):  # PyTorch weight_norm(dim=0) on a Conv1d weight v: (Cout, Cin, K)
        n = jnp.sqrt(jnp.sum(v * v, axis=(1, 2), keepdims=True))
        return v / n

    in_c = input_size
    for i, out_c in enumerate(num_channels):
        blk = layout["blocks"][i]
        ks = jax.random.split(jax.random.fold_in(key, i), 6)
        v1 = 0.01 * jax.random.normal(ks[0], (out_c, in_c, K), jnp.float32)
        b1 = 0.01 * jax.random.normal(ks[1], (out_c,), jnp.float32)
        v2 = 0.01 * jax.random.normal(ks[2], (out_c, out_c, K), jnp.float32)
        b2 = 0.01 * jax.random.normal(ks[3], (out_c,), jnp.float32)
        w1 = jnp.transpose(wnorm(v1), (2, 1, 0))            # (K, in_c, out_c)
        w2 = jnp.transpose(wnorm(v2), (2, 1, 0))            # (K, out_c, out_c)
        wpack = wpack.at[blk["w1"]:blk["w1"] + K * in_c, :out_c].set(
            w1.reshape(K * in_c, out_c))
        wpack = wpack.at[blk["w2"]:blk["w2"] + K * out_c, :out_c].set(
            w2.reshape(K * out_c, out_c))
        bpack = bpack.at[blk["b1"], :out_c].set(b1)
        bpack = bpack.at[blk["b2"], :out_c].set(b2)
        wd = bd = None
        if blk["down"] is not None:
            wd_t = 0.01 * jax.random.normal(ks[4], (out_c, in_c, 1), jnp.float32)
            bd = 0.01 * jax.random.normal(ks[5], (out_c,), jnp.float32)
            wd = jnp.transpose(wd_t, (2, 1, 0))              # (1, in_c, out_c)
            woff, boff = blk["down"]
            wpack = wpack.at[woff:woff + in_c, :out_c].set(wd[0])
            bpack = bpack.at[boff, :out_c].set(bd)
        raw_blocks.append((w1, b1, w2, b2, wd, bd))
        in_c = out_c

    kd = jax.random.split(jax.random.fold_in(key, 1000), 4)
    dec1_w = 0.1 * jax.random.normal(kd[0], (in_c, output_size), jnp.float32)
    dec1_b = 0.1 * jax.random.normal(kd[1], (output_size,), jnp.float32)
    dec2_w = 0.1 * jax.random.normal(kd[2], (in_c, 1), jnp.float32)
    dec2_b = 0.1 * jax.random.normal(kd[3], (1,), jnp.float32)
    head_w = jnp.concatenate([dec1_w, dec2_w], axis=1)       # (C_last, H)
    head_b = jnp.concatenate([dec1_b, dec2_b])                # (H,)
    hd = layout["head"]
    wpack = wpack.at[hd["w"]:hd["w"] + in_c, :hd["h"]].set(head_w)
    bpack = bpack.at[hd["b"], :hd["h"]].set(head_b)

    raw = {"blocks": raw_blocks, "head_w": head_w, "head_b": head_b}
    return wpack.astype(jnp.bfloat16), bpack, layout, raw


# ---------------------------------------------------------------------------
# Fused TCN kernel (all blocks + decoder heads in one pallas_call)
# ---------------------------------------------------------------------------

def _make_tcn_kernel(layout, L, Bt):
    K = layout["K"]
    blocks = layout["blocks"]
    head = layout["head"]
    M = Bt * L

    def kernel(x_ref, w_ref, b_ref, out_ref):
        # Flatten (Bt, L, Cin) -> (Bt*L, Cin): batch folded into the matmul M dim.
        y = x_ref[...].reshape(M, blocks[0]["cin"]).astype(jnp.float32)

        row_t = lax.broadcasted_iota(jnp.int32, (M, 1), 0)
        if Bt > 1:
            row_t = row_t % L                 # timestep within each flattened sequence

        def shifted(x, s):
            # Causal shift inside each sequence: y[t] = x[t-s], zero for t < s.
            if s == 0:
                return x
            r = pltpu.roll(x, shift=s, axis=0)          # XLU sublane rotate
            return jnp.where(row_t < s, 0.0, r)         # kills cross-sequence wrap

        def conv(x, woff, boff, cin, cout, d):
            # Dilated causal conv (== Conv1d(pad=(K-1)*d, dilation=d) + Chomp1d):
            # the K taps are fused into ONE MXU matmul by stacking shifted inputs
            # along the channel axis against a (K*cin, cout) packed weight slab.
            taps = [k for k in range(K) if (K - 1 - k) * d < L]   # drop dead taps
            b = b_ref[boff:boff + 1, 0:cout]                       # f32 (1, cout)
            if not taps:
                return jnp.zeros((M, cout), jnp.float32) + b
            kmin = taps[0]
            parts = [shifted(x, (K - 1 - k) * d) for k in taps]
            xs = parts[0] if len(parts) == 1 else jnp.concatenate(parts, axis=1)
            w = w_ref[woff + kmin * cin: woff + K * cin, 0:cout]   # bf16 slab
            return jnp.dot(xs.astype(jnp.bfloat16), w,
                           preferred_element_type=jnp.float32) + b

        for blk in blocks:                    # whole network unrolled in the body
            d, cin, cout = blk["d"], blk["cin"], blk["cout"]
            h = jnp.maximum(conv(y, blk["w1"], blk["b1"], cin, cout, d), 0.0)
            h = jnp.maximum(conv(h, blk["w2"], blk["b2"], cout, cout, d), 0.0)
            if blk["down"] is not None:       # 1x1 downsample residual
                woff, boff = blk["down"]
                wd = w_ref[woff:woff + cin, 0:cout]
                bd = b_ref[boff:boff + 1, 0:cout]
                res = jnp.dot(y.astype(jnp.bfloat16), wd,
                              preferred_element_type=jnp.float32) + bd
            else:
                res = y
            y = jnp.maximum(h + res, 0.0)     # residual add + relu (dropout = eval)

        # Decoder heads (fused): only the last timestep of every sequence is used.
        c_last, H = head["c"], head["h"]
        y_last = y.reshape(Bt, L, c_last)[:, L - 1, :]             # (Bt, c_last)
        hw = w_ref[head["w"]:head["w"] + c_last, 0:H]
        hb = b_ref[head["b"]:head["b"] + 1, 0:H]
        o = jnp.dot(y_last.astype(jnp.bfloat16), hw,
                    preferred_element_type=jnp.float32) + hb
        out_ref[...] = o.reshape(1, Bt, H).astype(out_ref.dtype)

    return kernel


# ---------------------------------------------------------------------------
# Wrapper
# ---------------------------------------------------------------------------

def _pick_batch_tile(B, L):
    # Fold enough batch per grid step to give the matmuls a real M dimension,
    # but keep >= 2 grid steps (v7x has 2 TensorCores on the "parallel" axis)
    # when that still leaves >= 256 rows per step.
    bt = min(B, max(1, 256 // max(L, 1)))
    while B % bt != 0:                        # Bt must divide B exactly
        bt -= 1
    if B % 2 == 0 and (B // 2) * L >= 256:
        bt = min(bt, B // 2)
    return bt


def make_tcn_forward(layout, L, B, output_size, batch_tile=None):
    Bt = batch_tile if batch_tile is not None else _pick_batch_tile(B, L)
    assert B % Bt == 0
    steps = B // Bt
    H = layout["head"]["h"]
    cin0 = layout["blocks"][0]["cin"]
    kernel = _make_tcn_kernel(layout, L, Bt)

    @jax.jit
    def fwd(emb, wpack, bpack):
        out = pl.pallas_call(
            kernel,
            out_shape=jax.ShapeDtypeStruct((steps, Bt, H), emb.dtype),
            grid_spec=pl.GridSpec(
                grid=(steps,),
                in_specs=[
                    pl.BlockSpec((Bt, L, cin0), lambda i: (i, 0, 0)),
                    pl.BlockSpec(wpack.shape, lambda i: (0, 0)),   # one packed DMA
                    pl.BlockSpec(bpack.shape, lambda i: (0, 0)),   # one packed DMA
                ],
                out_specs=pl.BlockSpec((1, Bt, H), lambda i: (i, 0, 0)),
            ),
            compiler_params=pltpu.CompilerParams(
                dimension_semantics=("parallel",)),                # v7x: 2 TCs
        )(emb, wpack, bpack)
        out = out.reshape(B, H)
        return out[:, :output_size], out[:, output_size:]

    return fwd


# ---------------------------------------------------------------------------
# Pure-JAX reference (f32) for correctness checking
# ---------------------------------------------------------------------------

def tcn_reference(emb, raw, dilations, output_size):
    B, L, _ = emb.shape
    hp = jax.lax.Precision.HIGHEST

    def conv(x, w, b, d):
        Kk = w.shape[0]
        acc = jnp.zeros(x.shape[:2] + (w.shape[-1],), jnp.float32)
        for k in range(Kk):
            s = (Kk - 1 - k) * d
            xs = jnp.pad(x, ((0, 0), (s, 0), (0, 0)))[:, :L, :]
            acc = acc + jnp.einsum("blc,cd->bld", xs, w[k], precision=hp)
        return acc + b

    y = emb
    for (w1, b1, w2, b2, wd, bd), d in zip(raw["blocks"], dilations):
        h = jax.nn.relu(conv(y, w1, b1, d))
        h = jax.nn.relu(conv(h, w2, b2, d))
        res = y if wd is None else jnp.einsum("blc,cd->bld", y, wd[0],
                                              precision=hp) + bd
        y = jax.nn.relu(h + res)
    o = jnp.einsum("bc,ch->bh", y[:, -1, :], raw["head_w"],
                   precision=hp) + raw["head_b"]
    return o[:, :output_size], o[:, output_size:]


# ---------------------------------------------------------------------------
# Main
# ---------------------------------------------------------------------------

if __name__ == "__main__":
    B, L = 2, 16
    input_size = 8
    # decoder = Linear(input_size, ...) requires num_channels[-1] == input_size
    num_channels = [16, 8, 8]
    kernel_size = 2
    output_size = 4

    key = jax.random.PRNGKey(0)
    k_emb, k_par = jax.random.split(key)

    # Synthetic "Informer encoder output" embedding (see TODO above), channel-last.
    emb = jax.random.normal(k_emb, (B, L, input_size), jnp.float32)

    wpack, bpack, layout, raw = init_tcn_params(
        k_par, input_size, num_channels, kernel_size, output_size)

    fwd = make_tcn_forward(layout, L, B, output_size)
    o1, o2 = fwd(emb, wpack, bpack)
    o1 = jax.block_until_ready(o1)
    o2 = jax.block_until_ready(o2)

    assert o1.shape == (B, output_size)
    assert o2.shape == (B, 1)

    # Loose tolerance: kernel matmuls use bf16 operands with f32 accumulation.
    r1, r2 = tcn_reference(emb, raw, [2 ** i for i in range(len(num_channels))],
                           output_size)
    assert float(jnp.max(jnp.abs(o1 - r1))) < 5e-2
    assert float(jnp.max(jnp.abs(o2 - r2))) < 5e-2

    print("KERNEL_OK")
</pallas_src>

<mosaic_0001>
module attributes {stable_mosaic.version = 11 : i64} {
  func.func @kernel(%arg0: i32, %arg1: memref<2x16x8xf32, #tpu.memory_space<vmem>>, %arg2: memref<176x128xbf16, #tpu.memory_space<vmem>>, %arg3: memref<16x128xf32, #tpu.memory_space<vmem>>, %arg4: memref<1x2x5xf32, #tpu.memory_space<vmem>>) attributes {dimension_semantics = [#tpu.dimension_semantics<parallel>], iteration_bounds = array<i64: 1>, scalar_prefetch = 0 : i64, scratch_operands = 0 : i64, tpu.core_type = #tpu.core_type<tc>, window_params = [{transform_indices = @transform_0, window_bounds = array<i64: 2, 16, 8>}, {pipeline_mode = #tpu.pipeline_mode<synchronous>, transform_indices = @transform_1, window_bounds = array<i64: 176, 128>}, {pipeline_mode = #tpu.pipeline_mode<synchronous>, transform_indices = @transform_2, window_bounds = array<i64: 16, 128>}, {transform_indices = @transform_3, window_bounds = array<i64: 1, 2, 5>}]} {
    %c0 = arith.constant 0 : index
    %c0_0 = arith.constant 0 : index
    %c0_1 = arith.constant 0 : index
    %0 = vector.load %arg1[%c0, %c0_0, %c0_1] : memref<2x16x8xf32, #tpu.memory_space<vmem>>, vector<2x16x8xf32>
    %1 = vector.shape_cast %0 : vector<2x16x8xf32> to vector<32x8xf32>
    %2 = tpu.iota {dimensions = array<i32: 0>} : vector<32x1xi32>
    %c16_i32 = arith.constant 16 : i32
    %c0_i32 = arith.constant 0 : i32
    %3 = arith.cmpi eq, %c16_i32, %c0_i32 : i32
    %c1_i32 = arith.constant 1 : i32
    %4 = arith.select %3, %c1_i32, %c16_i32 : i32
    %5 = vector.broadcast %4 : i32 to vector<32x1xi32>
    %6 = arith.remsi %2, %5 : vector<32x1xi32>
    %c0_i32_2 = arith.constant 0 : i32
    %7 = vector.broadcast %c0_i32_2 : i32 to vector<32x1xi32>
    %8 = arith.cmpi ne, %6, %7 : vector<32x1xi32>
    %c0_i32_3 = arith.constant 0 : i32
    %9 = vector.broadcast %c0_i32_3 : i32 to vector<32x1xi32>
    %10 = arith.cmpi slt, %6, %9 : vector<32x1xi32>
    %c0_i32_4 = arith.constant 0 : i32
    %11 = arith.cmpi slt, %4, %c0_i32_4 : i32
    %12 = vector.broadcast %11 : i1 to vector<32x1xi1>
    %13 = vector.broadcast %12 : vector<32x1xi1> to vector<32x1xi1>
    %14 = arith.xori %10, %13 : vector<32x1xi1>
    %15 = arith.andi %14, %8 : vector<32x1xi1>
    %16 = vector.broadcast %4 : i32 to vector<32x1xi32>
    %17 = arith.addi %6, %16 : vector<32x1xi32>
    %18 = arith.select %15, %17, %6 : vector<32x1xi1>, vector<32x1xi32>
    %c0_5 = arith.constant 0 : index
    %c0_6 = arith.constant 0 : index
    %19 = vector.load %arg3[%c0_5, %c0_6] : memref<16x128xf32, #tpu.memory_space<vmem>>, vector<1x16xf32>
    %c1_i32_7 = arith.constant 1 : i32
    %20 = tpu.dynamic_rotate %1 by %c1_i32_7 dim 0 : vector<32x8xf32>, i32 -> vector<32x8xf32>
    %c1_i32_8 = arith.constant 1 : i32
    %21 = vector.broadcast %c1_i32_8 : i32 to vector<32x1xi32>
    %22 = arith.cmpi slt, %18, %21 : vector<32x1xi32>
    %cst = arith.constant 0.000000e+00 : f32
    %23 = vector.shape_cast %22 : vector<32x1xi1> to vector<32x1xi1>
    %24 = vector.broadcast %23 : vector<32x1xi1> to vector<32x8xi1>
    %25 = vector.broadcast %cst : f32 to vector<32x8xf32>
    %26 = arith.select %24, %25, %20 : vector<32x8xi1>, vector<32x8xf32>
    %27 = tpu.concatenate %26, %1 in 1 : vector<32x8xf32>, vector<32x8xf32> -> vector<32x16xf32>
    %c0_9 = arith.constant 0 : index
    %c0_10 = arith.constant 0 : index
    %28 = vector.load %arg2[%c0_9, %c0_10] : memref<176x128xbf16, #tpu.memory_space<vmem>>, vector<16x16xbf16>
    %29 = arith.truncf %27 : vector<32x16xf32> to vector<32x16xbf16>
    %cst_11 = arith.constant dense<0.000000e+00> : vector<32x16xf32>
    %30 = tpu.matmul %29, %28, %cst_11 {dimension_numbers = #tpu.dot_dimension_numbers<[1], [0], [0], [1], [0, 0, 1, 1], [], []>} : vector<32x16xbf16>, vector<16x16xbf16>, vector<32x16xf32> -> vector<32x16xf32>
    %31 = vector.broadcast %19 : vector<1x16xf32> to vector<32x16xf32>
    %32 = arith.addf %30, %31 : vector<32x16xf32>
    %cst_12 = arith.constant 0.000000e+00 : f32
    %33 = vector.broadcast %cst_12 : f32 to vector<32x16xf32>
    %34 = arith.maximumf %32, %33 : vector<32x16xf32>
    %c1 = arith.constant 1 : index
    %c0_13 = arith.constant 0 : index
    %35 = vector.load %arg3[%c1, %c0_13] : memref<16x128xf32, #tpu.memory_space<vmem>>, vector<1x16xf32>
    %c1_i32_14 = arith.constant 1 : i32
    %36 = tpu.dynamic_rotate %34 by %c1_i32_14 dim 0 : vector<32x16xf32>, i32 -> vector<32x16xf32>
    %c1_i32_15 = arith.constant 1 : i32
    %37 = vector.broadcast %c1_i32_15 : i32 to vector<32x1xi32>
    %38 = arith.cmpi slt, %18, %37 : vector<32x1xi32>
    %cst_16 = arith.constant 0.000000e+00 : f32
    %39 = vector.shape_cast %38 : vector<32x1xi1> to vector<32x1xi1>
    %40 = vector.broadcast %39 : vector<32x1xi1> to vector<32x16xi1>
    %41 = vector.broadcast %cst_16 : f32 to vector<32x16xf32>
    %42 = arith.select %40, %41, %36 : vector<32x16xi1>, vector<32x16xf32>
    %43 = tpu.concatenate %42, %34 in 1 : vector<32x16xf32>, vector<32x16xf32> -> vector<32x32xf32>
    %c16 = arith.constant 16 : index
    %c0_17 = arith.constant 0 : index
    %44 = vector.load %arg2[%c16, %c0_17] : memref<176x128xbf16, #tpu.memory_space<vmem>>, vector<32x16xbf16>
    %45 = arith.truncf %43 : vector<32x32xf32> to vector<32x32xbf16>
    %cst_18 = arith.constant dense<0.000000e+00> : vector<32x16xf32>
    %46 = tpu.matmul %45, %44, %cst_18 {dimension_numbers = #tpu.dot_dimension_numbers<[1], [0], [0], [1], [0, 0, 1, 1], [], []>} : vector<32x32xbf16>, vector<32x16xbf16>, vector<32x16xf32> -> vector<32x16xf32>
    %47 = vector.broadcast %35 : vector<1x16xf32> to vector<32x16xf32>
    %48 = arith.addf %46, %47 : vector<32x16xf32>
    %cst_19 = arith.constant 0.000000e+00 : f32
    %49 = vector.broadcast %cst_19 : f32 to vector<32x16xf32>
    %50 = arith.maximumf %48, %49 : vector<32x16xf32>
    %c48 = arith.constant 48 : index
    %c0_20 = arith.constant 0 : index
    %51 = vector.load %arg2[%c48, %c0_20] : memref<176x128xbf16, #tpu.memory_space<vmem>>, vector<8x16xbf16>
    %c2 = arith.constant 2 : index
    %c0_21 = arith.constant 0 : index
    %52 = vector.load %arg3[%c2, %c0_21] : memref<16x128xf32, #tpu.memory_space<vmem>>, vector<1x16xf32>
    %53 = arith.truncf %1 : vector<32x8xf32> to vector<32x8xbf16>
    %cst_22 = arith.constant dense<0.000000e+00> : vector<32x16xf32>
    %54 = tpu.matmul %53, %51, %cst_22 {dimension_numbers = #tpu.dot_dimension_numbers<[1], [0], [0], [1], [0, 0, 1, 1], [], []>} : vector<32x8xbf16>, vector<8x16xbf16>, vector<32x16xf32> -> vector<32x16xf32>
    %55 = vector.broadcast %52 : vector<1x16xf32> to vector<32x16xf32>
    %56 = arith.addf %54, %55 : vector<32x16xf32>
    %57 = arith.addf %50, %56 : vector<32x16xf32>
    %cst_23 = arith.constant 0.000000e+00 : f32
    %58 = vector.broadcast %cst_23 : f32 to vector<32x16xf32>
    %59 = arith.maximumf %57, %58 : vector<32x16xf32>
    %c3 = arith.constant 3 : index
    %c0_24 = arith.constant 0 : index
    %60 = vector.load %arg3[%c3, %c0_24] : memref<16x128xf32, #tpu.memory_space<vmem>>, vector<1x8xf32>
    %c2_i32 = arith.constant 2 : i32
    %61 = tpu.dynamic_rotate %59 by %c2_i32 dim 0 : vector<32x16xf32>, i32 -> vector<32x16xf32>
    %c2_i32_25 = arith.constant 2 : i32
    %62 = vector.broadcast %c2_i32_25 : i32 to vector<32x1xi32>
    %63 = arith.cmpi slt, %18, %62 : vector<32x1xi32>
    %cst_26 = arith.constant 0.000000e+00 : f32
    %64 = vector.shape_cast %63 : vector<32x1xi1> to vector<32x1xi1>
    %65 = vector.broadcast %64 : vector<32x1xi1> to vector<32x16xi1>
    %66 = vector.broadcast %cst_26 : f32 to vector<32x16xf32>
    %67 = arith.select %65, %66, %61 : vector<32x16xi1>, vector<32x16xf32>
    %68 = tpu.concatenate %67, %59 in 1 : vector<32x16xf32>, vector<32x16xf32> -> vector<32x32xf32>
    %c64 = arith.constant 64 : index
    %c0_27 = arith.constant 0 : index
    %69 = vector.load %arg2[%c64, %c0_27] : memref<176x128xbf16, #tpu.memory_space<vmem>>, vector<32x8xbf16>
    %70 = arith.truncf %68 : vector<32x32xf32> to vector<32x32xbf16>
    %cst_28 = arith.constant dense<0.000000e+00> : vector<32x8xf32>
    %71 = tpu.matmul %70, %69, %cst_28 {dimension_numbers = #tpu.dot_dimension_numbers<[1], [0], [0], [1], [0, 0, 1, 1], [], []>} : vector<32x32xbf16>, vector<32x8xbf16>, vector<32x8xf32> -> vector<32x8xf32>
    %72 = vector.broadcast %60 : vector<1x8xf32> to vector<32x8xf32>
    %73 = arith.addf %71, %72 : vector<32x8xf32>
    %cst_29 = arith.constant 0.000000e+00 : f32
    %74 = vector.broadcast %cst_29 : f32 to vector<32x8xf32>
    %75 = arith.maximumf %73, %74 : vector<32x8xf32>
    %c4 = arith.constant 4 : index
    %c0_30 = arith.constant 0 : index
    %76 = vector.load %arg3[%c4, %c0_30] : memref<16x128xf32, #tpu.memory_space<vmem>>, vector<1x8xf32>
    %c2_i32_31 = arith.constant 2 : i32
    %77 = tpu.dynamic_rotate %75 by %c2_i32_31 dim 0 : vector<32x8xf32>, i32 -> vector<32x8xf32>
    %c2_i32_32 = arith.constant 2 : i32
    %78 = vector.broadcast %c2_i32_32 : i32 to vector<32x1xi32>
    %79 = arith.cmpi slt, %18, %78 : vector<32x1xi32>
    %cst_33 = arith.constant 0.000000e+00 : f32
    %80 = vector.shape_cast %79 : vector<32x1xi1> to vector<32x1xi1>
    %81 = vector.broadcast %80 : vector<32x1xi1> to vector<32x8xi1>
    %82 = vector.broadcast %cst_33 : f32 to vector<32x8xf32>
    %83 = arith.select %81, %82, %77 : vector<32x8xi1>, vector<32x8xf32>
    %84 = tpu.concatenate %83, %75 in 1 : vector<32x8xf32>, vector<32x8xf32> -> vector<32x16xf32>
    %c96 = arith.constant 96 : index
    %c0_34 = arith.constant 0 : index
    %85 = vector.load %arg2[%c96, %c0_34] : memref<176x128xbf16, #tpu.memory_space<vmem>>, vector<16x8xbf16>
    %86 = arith.truncf %84 : vector<32x16xf32> to vector<32x16xbf16>
    %cst_35 = arith.constant dense<0.000000e+00> : vector<32x8xf32>
    %87 = tpu.matmul %86, %85, %cst_35 {dimension_numbers = #tpu.dot_dimension_numbers<[1], [0], [0], [1], [0, 0, 1, 1], [], []>} : vector<32x16xbf16>, vector<16x8xbf16>, vector<32x8xf32> -> vector<32x8xf32>
    %88 = vector.broadcast %76 : vector<1x8xf32> to vector<32x8xf32>
    %89 = arith.addf %87, %88 : vector<32x8xf32>
    %cst_36 = arith.constant 0.000000e+00 : f32
    %90 = vector.broadcast %cst_36 : f32 to vector<32x8xf32>
    %91 = arith.maximumf %89, %90 : vector<32x8xf32>
    %c112 = arith.constant 112 : index
    %c0_37 = arith.constant 0 : index
    %92 = vector.load %arg2[%c112, %c0_37] : memref<176x128xbf16, #tpu.memory_space<vmem>>, vector<16x8xbf16>
    %c5 = arith.constant 5 : index
    %c0_38 = arith.constant 0 : index
    %93 = vector.load %arg3[%c5, %c0_38] : memref<16x128xf32, #tpu.memory_space<vmem>>, vector<1x8xf32>
    %94 = arith.truncf %59 : vector<32x16xf32> to vector<32x16xbf16>
    %cst_39 = arith.constant dense<0.000000e+00> : vector<32x8xf32>
    %95 = tpu.matmul %94, %92, %cst_39 {dimension_numbers = #tpu.dot_dimension_numbers<[1], [0], [0], [1], [0, 0, 1, 1], [], []>} : vector<32x16xbf16>, vector<16x8xbf16>, vector<32x8xf32> -> vector<32x8xf32>
    %96 = vector.broadcast %93 : vector<1x8xf32> to vector<32x8xf32>
    %97 = arith.addf %95, %96 : vector<32x8xf32>
    %98 = arith.addf %91, %97 : vector<32x8xf32>
    %cst_40 = arith.constant 0.000000e+00 : f32
    %99 = vector.broadcast %cst_40 : f32 to vector<32x8xf32>
    %100 = arith.maximumf %98, %99 : vector<32x8xf32>
    %c6 = arith.constant 6 : index
    %c0_41 = arith.constant 0 : index
    %101 = vector.load %arg3[%c6, %c0_41] : memref<16x128xf32, #tpu.memory_space<vmem>>, vector<1x8xf32>
    %c4_i32 = arith.constant 4 : i32
    %102 = tpu.dynamic_rotate %100 by %c4_i32 dim 0 : vector<32x8xf32>, i32 -> vector<32x8xf32>
    %c4_i32_42 = arith.constant 4 : i32
    %103 = vector.broadcast %c4_i32_42 : i32 to vector<32x1xi32>
    %104 = arith.cmpi slt, %18, %103 : vector<32x1xi32>
    %cst_43 = arith.constant 0.000000e+00 : f32
    %105 = vector.shape_cast %104 : vector<32x1xi1> to vector<32x1xi1>
    %106 = vector.broadcast %105 : vector<32x1xi1> to vector<32x8xi1>
    %107 = vector.broadcast %cst_43 : f32 to vector<32x8xf32>
    %108 = arith.select %106, %107, %102 : vector<32x8xi1>, vector<32x8xf32>
    %109 = tpu.concatenate %108, %100 in 1 : vector<32x8xf32>, vector<32x8xf32> -> vector<32x16xf32>
    %c128 = arith.constant 128 : index
    %c0_44 = arith.constant 0 : index
    %110 = vector.load %arg2[%c128, %c0_44] : memref<176x128xbf16, #tpu.memory_space<vmem>>, vector<16x8xbf16>
    %111 = arith.truncf %109 : vector<32x16xf32> to vector<32x16xbf16>
    %cst_45 = arith.constant dense<0.000000e+00> : vector<32x8xf32>
    %112 = tpu.matmul %111, %110, %cst_45 {dimension_numbers = #tpu.dot_dimension_numbers<[1], [0], [0], [1], [0, 0, 1, 1], [], []>} : vector<32x16xbf16>, vector<16x8xbf16>, vector<32x8xf32> -> vector<32x8xf32>
    %113 = vector.broadcast %101 : vector<1x8xf32> to vector<32x8xf32>
    %114 = arith.addf %112, %113 : vector<32x8xf32>
    %cst_46 = arith.constant 0.000000e+00 : f32
    %115 = vector.broadcast %cst_46 : f32 to vector<32x8xf32>
    %116 = arith.maximumf %114, %115 : vector<32x8xf32>
    %c7 = arith.constant 7 : index
    %c0_47 = arith.constant 0 : index
    %117 = vector.load %arg3[%c7, %c0_47] : memref<16x128xf32, #tpu.memory_space<vmem>>, vector<1x8xf32>
    %c4_i32_48 = arith.constant 4 : i32
    %118 = tpu.dynamic_rotate %116 by %c4_i32_48 dim 0 : vector<32x8xf32>, i32 -> vector<32x8xf32>
    %c4_i32_49 = arith.constant 4 : i32
    %119 = vector.broadcast %c4_i32_49 : i32 to vector<32x1xi32>
    %120 = arith.cmpi slt, %18, %119 : vector<32x1xi32>
    %cst_50 = arith.constant 0.000000e+00 : f32
    %121 = vector.shape_cast %120 : vector<32x1xi1> to vector<32x1xi1>
    %122 = vector.broadcast %121 : vector<32x1xi1> to vector<32x8xi1>
    %123 = vector.broadcast %cst_50 : f32 to vector<32x8xf32>
    %124 = arith.select %122, %123, %118 : vector<32x8xi1>, vector<32x8xf32>
    %125 = tpu.concatenate %124, %116 in 1 : vector<32x8xf32>, vector<32x8xf32> -> vector<32x16xf32>
    %c144 = arith.constant 144 : index
    %c0_51 = arith.constant 0 : index
    %126 = vector.load %arg2[%c144, %c0_51] : memref<176x128xbf16, #tpu.memory_space<vmem>>, vector<16x8xbf16>
    %127 = arith.truncf %125 : vector<32x16xf32> to vector<32x16xbf16>
    %cst_52 = arith.constant dense<0.000000e+00> : vector<32x8xf32>
    %128 = tpu.matmul %127, %126, %cst_52 {dimension_numbers = #tpu.dot_dimension_numbers<[1], [0], [0], [1], [0, 0, 1, 1], [], []>} : vector<32x16xbf16>, vector<16x8xbf16>, vector<32x8xf32> -> vector<32x8xf32>
    %129 = vector.broadcast %117 : vector<1x8xf32> to vector<32x8xf32>
    %130 = arith.addf %128, %129 : vector<32x8xf32>
    %cst_53 = arith.constant 0.000000e+00 : f32
    %131 = vector.broadcast %cst_53 : f32 to vector<32x8xf32>
    %132 = arith.maximumf %130, %131 : vector<32x8xf32>
    %133 = arith.addf %132, %100 : vector<32x8xf32>
    %cst_54 = arith.constant 0.000000e+00 : f32
    %134 = vector.broadcast %cst_54 : f32 to vector<32x8xf32>
    %135 = arith.maximumf %133, %134 : vector<32x8xf32>
    %136 = vector.shape_cast %135 : vector<32x8xf32> to vector<2x16x8xf32>
    %137 = vector.extract_strided_slice %136 {offsets = [0, 15, 0], sizes = [2, 1, 8], strides = [1, 1, 1]} : vector<2x16x8xf32> to vector<2x1x8xf32>
    %138 = vector.shape_cast %137 : vector<2x1x8xf32> to vector<2x8xf32>
    %c160 = arith.constant 160 : index
    %c0_55 = arith.constant 0 : index
    %139 = vector.load %arg2[%c160, %c0_55] : memref<176x128xbf16, #tpu.memory_space<vmem>>, vector<8x5xbf16>
    %c8 = arith.constant 8 : index
    %c0_56 = arith.constant 0 : index
    %140 = vector.load %arg3[%c8, %c0_56] : memref<16x128xf32, #tpu.memory_space<vmem>>, vector<1x5xf32>
    %141 = arith.truncf %138 : vector<2x8xf32> to vector<2x8xbf16>
    %cst_57 = arith.constant dense<0.000000e+00> : vector<2x5xf32>
    %142 = tpu.matmul %141, %139, %cst_57 {dimension_numbers = #tpu.dot_dimension_numbers<[1], [0], [0], [1], [0, 0, 1, 1], [], []>} : vector<2x8xbf16>, vector<8x5xbf16>, vector<2x5xf32> -> vector<2x5xf32>
    %143 = vector.broadcast %140 : vector<1x5xf32> to vector<2x5xf32>
    %144 = arith.addf %142, %143 : vector<2x5xf32>
    %145 = vector.shape_cast %144 : vector<2x5xf32> to vector<1x2x5xf32>
    %c0_58 = arith.constant 0 : index
    %c0_59 = arith.constant 0 : index
    %c0_60 = arith.constant 0 : index
    %146 = vector.load %arg4[%c0_58, %c0_59, %c0_60] : memref<1x2x5xf32, #tpu.memory_space<vmem>>, vector<1x2x5xf32>
    tpu.vector_store %arg4[%c0_58, %c0_59, %c0_60], %145 {strides = array<i32>} : memref<1x2x5xf32, #tpu.memory_space<vmem>>, vector<1x2x5xf32>,
    return
  }
  func.func @transform_0(%arg0: i32) -> (i32, i32, i32) {
    %c0_i32 = arith.constant 0 : i32
    %c0_i32_0 = arith.constant 0 : i32
    %c0_i32_1 = arith.constant 0 : i32
    return %arg0, %c0_i32, %c0_i32_0 : i32, i32, i32
  }
  func.func @transform_1(%arg0: i32) -> (i32, i32) {
    %c0_i32 = arith.constant 0 : i32
    %c0_i32_0 = arith.constant 0 : i32
    %c0_i32_1 = arith.constant 0 : i32
    return %c0_i32, %c0_i32_0 : i32, i32
  }
  func.func @transform_2(%arg0: i32) -> (i32, i32) {
    %c0_i32 = arith.constant 0 : i32
    %c0_i32_0 = arith.constant 0 : i32
    %c0_i32_1 = arith.constant 0 : i32
    return %c0_i32, %c0_i32_0 : i32, i32
  }
  func.func @transform_3(%arg0: i32) -> (i32, i32, i32) {
    %c0_i32 = arith.constant 0 : i32
    %c0_i32_0 = arith.constant 0 : i32
    %c0_i32_1 = arith.constant 0 : i32
    return %arg0, %c0_i32, %c0_i32_0 : i32, i32, i32
  }
}

</mosaic_0001>

<llo_original>
// kernel: fwd.1
$region0: #{fwd.1}
  #allocation0 [shape = 'u32[]', space=smem, size = 0x4, offset = 0x4, fixed_abs, tag = 'smem constant byte address 0x4 - core index']
  #allocation1 [shape = 'u32[144,128]{1,0:T(1,128)}', space=vmem, size = 0x12000, scoped, tag = 'internal scratch']
  %s0 = inlined_call_operand.vmem [shape: f32[2,16,8], index: 0, kind: input, shape index: {}]
  %s1 = inlined_call_operand.hbm [shape: bf16[176,128], index: 1, kind: input, shape index: {}]
  %s2 = inlined_call_operand.vmem [shape: f32[16,128], index: 2, kind: input, shape index: {}]
  %s3 = inlined_call_operand.vmem [shape: f32[1,2,5], index: 3, kind: output, shape index: {}]
  %s4 = sld [smem:[#allocation0]]
  $region26: #{fwd.1} parent=0
    _
  %s6 = ssub.s32 1, %s4
  %s7 = scalar_select 0, %s6, %s4
  $region1: #{fwd.1} parent=0
    #allocation2 [shape = 'u8[45056]{0}', space=vmem, size = 0xb000, scoped, tag = 'input window, operand 1, single buffered']
    #allocation3 [shape = 's32[1]{0}', space=sflag, size = 0x4, scoped, tag = 'scoped memory for fwd.1']
    %8 = vsyncpa [#allocation3], 0
    // Predicated region
    $region2: #{fwd.1} parent=1 // pred_check
      _
    $region3: #{fwd.1} parent=1 // pred_check_branch
      %10 = sbr.rel (0) target = $region5
    $region4: #{fwd.1} parent=1 // pred_region
      _
    $region5: #{fwd.1} parent=1 // pred_fallthru
      _
    // Predicated region
    $region6: #{fwd.1} parent=1 // pred_check
      _
    $region7: #{fwd.1} parent=1 // pred_check_branch
      %12 = sbr.rel (0) target = $region9
    $region8: #{fwd.1} parent=1 // pred_region
      %s14 = ssub.s32 1408, 1408
      %15 = vsyncadd [#allocation3], %s14
      %s16 = sshll.u32 [#allocation2], 4
      %s17 = int_to_ptr.vmem [resolvable:$true] %s16
      %22 = dma.hbm_to_vmem [thread:$0]  %s1, 1408, %s17, [#allocation3], 64, 64, 4
    $region9: #{fwd.1} parent=1 // pred_fallthru
      _
    // Predicated region
    $region10: #{fwd.1} parent=1 // pred_check
      _
    $region11: #{fwd.1} parent=1 // pred_check_branch
      %24 = sbr.rel (0) target = $region13
    $region12: #{fwd.1} parent=1 // pred_region
      _
    $region13: #{fwd.1} parent=1 // pred_fallthru
      _
    // Predicated region
    $region14: #{fwd.1} parent=1 // pred_check
      _
    $region15: #{fwd.1} parent=1 // pred_check_branch
      %26 = sbr.rel (0) target = $region17
    $region16: #{fwd.1} parent=1 // pred_region
      %27 = dma.done [#allocation3], 1408
    $region17: #{fwd.1} parent=1 // pred_fallthru
      _
    %v29 = vld [vmem:[%s0] sm:$0xff]
    %v30 = vld [vmem:[%s0 + $0x8] sm:$0xff]
    %v31 = vld [vmem:[%s0 + $0x10] sm:$0xff]
    %v32 = vld [vmem:[%s0 + $0x18] sm:$0xff]
    %v33 = vlaneseq
    %v34 = vshrl.u32 %v33, 7
    %v35 = vadd.s32 %v34, 8
    %v36 = vadd.s32 %v34, 16
    %v37 = vadd.s32 %v34, 24
    %vm38 = vcmp.lt.s32.totalorder %v34, 0
    %v39 = vsub.s32 0, %v34
    %v40 = vsel %vm38, %v39, %v34
    %v41 = vshrl.u32 %v40, 4
    %v42 = vand.u32 %v40, 15
    %v43 = vsub.s32 0, %v42
    %v44 = vsel %vm38, %v43, %v42
    %vm45 = vcmp.lt.s32.totalorder %v35, 0
    %v46 = vsub.s32 0, %v35
    %v47 = vsel %vm45, %v46, %v35
    %v48 = vshrl.u32 %v47, 4
    %v49 = vand.u32 %v47, 15
    %v50 = vsub.s32 0, %v49
    %v51 = vsel %vm45, %v50, %v49
    %vm52 = vcmp.lt.s32.totalorder %v36, 0
    %v53 = vsub.s32 0, %v36
    %v54 = vsel %vm52, %v53, %v36
    %v55 = vshrl.u32 %v54, 4
    %v56 = vand.u32 %v54, 15
    %v57 = vsub.s32 0, %v56
    %v58 = vsel %vm52, %v57, %v56
    %vm59 = vcmp.lt.s32.totalorder %v37, 0
    %v60 = vsub.s32 0, %v37
    %v61 = vsel %vm59, %v60, %v37
    %v62 = vshrl.u32 %v61, 4
    %v63 = vand.u32 %v61, 15
    %v64 = vsub.s32 0, %v63
    %v65 = vsel %vm59, %v64, %v63
    %vm66 = vcmp.ne.s32.totalorder %v44, 0
    %vm67 = vcmp.ne.s32.totalorder %v51, 0
    %vm68 = vcmp.ne.s32.totalorder %v58, 0
    %vm69 = vcmp.ne.s32.totalorder %v65, 0
    %vm70 = vcmp.lt.s32.totalorder %v44, 0
    %vm71 = vcmp.lt.s32.totalorder %v51, 0
    %vm72 = vcmp.lt.s32.totalorder %v58, 0
    %vm73 = vcmp.lt.s32.totalorder %v65, 0
    %vm74 = vmand %vm70, %vm66
    %vm75 = vmand %vm71, %vm67
    %vm76 = vmand %vm72, %vm68
    %vm77 = vmand %vm73, %vm69
    %v78 = vadd.s32 %v44, 16
    %v79 = vadd.s32 %v51, 16
    %v80 = vadd.s32 %v58, 16
    %v81 = vadd.s32 %v65, 16
    %v82 = vsel %vm74, %v78, %v44
    %v83 = vsel %vm75, %v79, %v51
    %v84 = vsel %vm76, %v80, %v58
    %v85 = vsel %vm77, %v81, %v65
    %v86 = vld [vmem:[%s2] sm:$0x1]
    %v87 = vrot.slane %v29, 7
    %v88 = vrot.slane %v30, 7
    %v89 = vrot.slane %v31, 7
    %v90 = vrot.slane %v32, 7
    %vm91 = vcmp.lt.s32.totalorder %v34, 1
    %v92 = vsel %vm91, %v89, %v90
    %v93 = vsel %vm91, %v88, %v89
    %v94 = vsel %vm91, %v87, %v88
    %v95 = vsel %vm91, %v90, %v87
    %vm96 = vcmp.lt.s32.totalorder %v82, 1
    %vm97 = vcmp.lt.s32.totalorder %v83, 1
    %vm98 = vcmp.lt.s32.totalorder %v84, 1
    %vm99 = vcmp.lt.s32.totalorder %v85, 1
    %v100 = vsel %vm96, 1, 0
    %v101 = vsel %vm97, 1, 0
    %v102 = vsel %vm98, 1, 0
    %v103 = vsel %vm99, 1, 0
    %vm104 = vcmp.eq.s32.totalorder %v100, 1
    %vm105 = vcmp.eq.s32.totalorder %v101, 1
    %vm106 = vcmp.eq.s32.totalorder %v102, 1
    %vm107 = vcmp.eq.s32.totalorder %v103, 1
    %v108 = vsel %vm104, 0.0, %v95
    %v109 = vsel %vm105, 0.0, %v94
    %v110 = vsel %vm106, 0.0, %v93
    %v111 = vsel %vm107, 0.0, %v92
    %116 = vrot.lane.b32.xlu0 %v29, 8
    %v117 = vpop.permute.xlu0 %116
    %118 = vrot.lane.b32.xlu0 %v30, 8
    %v119 = vpop.permute.xlu0 %118
    %120 = vrot.lane.b32.xlu0 %v31, 8
    %v121 = vpop.permute.xlu0 %120
    %122 = vrot.lane.b32.xlu0 %v32, 8
    %v123 = vpop.permute.xlu0 %122
    %vm128 = vcmask 64512
    %v129 = vsel %vm128, %v108, %v117
    %v130 = vsel %vm128, %v109, %v119
    %v131 = vsel %vm128, %v110, %v121
    %v132 = vsel %vm128, %v111, %v123
    %v133 = vld [vmem:[#allocation2] sm:$0xf]
    %v134 = vld [vmem:[#allocation2 + $0x4] sm:$0xf]
    %v135 = vpack.c.bf16 %v130, %v129
    %v136 = vpack.c.bf16 %v132, %v131
    %v137 = vlaneseq
    %v138 = vshrl.u32 %v137, 7
    %v139 = vsub.s32 0, %v138
    %v140 = vrot.slane %v86, %v139
    %v143 = vunpack.c.l.b16 %v133
    %v144 = vunpack.c.l.b16 %v134
    %v145 = vpack.c.b16 %v144, %v143
    %vm147 = vcmask 130048
    %v149 = vsel %vm147, %v135, 0
    %v152 = vsel %vm147, %v136, 0
    %154 = vmatprep.subr.bf16.mxu0 0
    %155 = vmatpush1.bf16.msra.mxu0 %v145
    %156 = vmatprep.subr.bf16.mxu0 0
    %157 = vmatpush1.bf16.msra.mxu0 0
    %158 = vmatprep.subr.bf16.mxu0 0
    %159 = vmatpush1.bf16.msra.mxu0 0
    %160 = vmatprep.subr.bf16.mxu0 0
    %161 = vmatpush1.bf16.msra.mxu0 0
    %162 = vmatprep.subr.bf16.mxu0 0
    %163 = vmatpush1.bf16.msra.mxu0 0
    %164 = vmatprep.subr.bf16.mxu0 0
    %165 = vmatpush1.bf16.msra.mxu0 0
    %166 = vmatprep.subr.bf16.mxu0 0
    %167 = vmatpush1.bf16.msra.mxu0 0
    %168 = vmatprep.subr.bf16.mxu0 0
    %169 = vmatpush1.bf16.msra.mxu0 0
    %170 = vmatprep.subr.bf16.mxu0 0
    %171 = vmatpush1.bf16.msra.mxu0 0
    %172 = vmatprep.subr.bf16.mxu0 0
    %173 = vmatpush1.bf16.msra.mxu0 0
    %174 = vmatprep.subr.bf16.mxu0 0
    %175 = vmatpush1.bf16.msra.mxu0 0
    %176 = vmatprep.subr.bf16.mxu0 0
    %177 = vmatpush1.bf16.msra.mxu0 0
    %178 = vmatprep.subr.bf16.mxu0 0
    %179 = vmatpush1.bf16.msra.mxu0 0
    %180 = vmatprep.subr.bf16.mxu0 0
    %181 = vmatpush1.bf16.msra.mxu0 0
    %182 = vmatprep.subr.bf16.mxu0 0
    %183 = vmatpush1.bf16.msra.mxu0 0
    %184 = vmatprep.subr.bf16.mxu0 0
    %185 = vmatpush1.bf16.msra.mxu0 0
    %186 = vmatprep.mubr.bf16.mxu0 0
    %187 = vmatmul.mubr.bf16.gmra.mrb[0].mxu0 %v149
    %v188 = vpop.f32.mrb[0].mxu0
    %v189 = vadd.f32 %v140, %v188
    %v190 = vpop.f32.mrb[0].mxu0
    %v191 = vpop.f32.mrb[0].mxu0
    %v192 = vadd.f32 %v140, %v191
    %v193 = vpop.f32.mrb[0].mxu0
    %194 = vmatprep.mubr.bf16.mxu0 0
    %195 = vmatmul.mubr.bf16.gmra.mrb[0].mxu0 %v152
    %v196 = vpop.f32.mrb[0].mxu0
    %v197 = vadd.f32 %v140, %v196
    %v198 = vpop.f32.mrb[0].mxu0
    %v199 = vpop.f32.mrb[0].mxu0
    %v200 = vadd.f32 %v140, %v199
    %v201 = vpop.f32.mrb[0].mxu0
    %202 = vdwg.mxu0
    %v203 = vmax.f32 %v189, 0.0
    %v204 = vmax.f32 %v192, 0.0
    %v205 = vmax.f32 %v197, 0.0
    %v206 = vmax.f32 %v200, 0.0
    %v207 = vld [vmem:[%s2 + $0x1] sm:$0x1]
    %v208 = vrot.slane %v203, 7
    %v209 = vrot.slane %v204, 7
    %v210 = vrot.slane %v205, 7
    %v211 = vrot.slane %v206, 7
    %v212 = vsel %vm91, %v210, %v211
    %v213 = vsel %vm91, %v209, %v210
    %v214 = vsel %vm91, %v208, %v209
    %v215 = vsel %vm91, %v211, %v208
    %v216 = vsel %vm104, 0.0, %v215
    %v217 = vsel %vm105, 0.0, %v214
    %v218 = vsel %vm106, 0.0, %v213
    %v219 = vsel %vm107, 0.0, %v212
    %224 = vrot.lane.b32.xlu0 %v203, 16
    %v225 = vpop.permute.xlu0 %224
    %226 = vrot.lane.b32.xlu0 %v204, 16
    %v227 = vpop.permute.xlu0 %226
    %228 = vrot.lane.b32.xlu0 %v205, 16
    %v229 = vpop.permute.xlu0 %228
    %230 = vrot.lane.b32.xlu0 %v206, 16
    %v231 = vpop.permute.xlu0 %230
    %v236 = vsel %vm147, %v216, %v225
    %v237 = vsel %vm147, %v217, %v227
    %v238 = vsel %vm147, %v218, %v229
    %v239 = vsel %vm147, %v219, %v231
    %v240 = vld [vmem:[#allocation2 + $0x8] sm:$0xf]
    %v241 = vld [vmem:[#allocation2 + $0xc] sm:$0xf]
    %v242 = vld [vmem:[#allocation2 + $0x10] sm:$0xf]
    %v243 = vld [vmem:[#allocation2 + $0x14] sm:$0xf]
    %v244 = vpack.c.bf16 %v237, %v236
    %v245 = vpack.c.bf16 %v239, %v238
    %v246 = vlaneseq
    %v247 = vshrl.u32 %v246, 7
    %v248 = vsub.s32 0, %v247
    %v249 = vrot.slane %v207, %v248
    %v254 = vunpack.c.l.b16 %v240
    %v255 = vunpack.c.l.b16 %v241
    %v256 = vunpack.c.l.b16 %v242
    %v257 = vunpack.c.l.b16 %v243
    %v258 = vpack.c.b16 %v255, %v254
    %v259 = vpack.c.b16 %v257, %v256
    %vm262 = vcmask 261120
    %v264 = vsel %vm262, %v244, 0
    %v267 = vsel %vm262, %v245, 0
    %269 = vmatprep.subr.bf16.mxu0 0
    %270 = vmatpush1.bf16.msra.mxu0 %v258
    %271 = vmatprep.subr.bf16.mxu0 0
    %272 = vmatpush1.bf16.msra.mxu0 %v259
    %273 = vmatprep.subr.bf16.mxu0 0
    %274 = vmatpush1.bf16.msra.mxu0 0
    %275 = vmatprep.subr.bf16.mxu0 0
    %276 = vmatpush1.bf16.msra.mxu0 0
    %277 = vmatprep.subr.bf16.mxu0 0
    %278 = vmatpush1.bf16.msra.mxu0 0
    %279 = vmatprep.subr.bf16.mxu0 0
    %280 = vmatpush1.bf16.msra.mxu0 0
    %281 = vmatprep.subr.bf16.mxu0 0
    %282 = vmatpush1.bf16.msra.mxu0 0
    %283 = vmatprep.subr.bf16.mxu0 0
    %284 = vmatpush1.bf16.msra.mxu0 0
    %285 = vmatprep.subr.bf16.mxu0 0
    %286 = vmatpush1.bf16.msra.mxu0 0
    %287 = vmatprep.subr.bf16.mxu0 0
    %288 = vmatpush1.bf16.msra.mxu0 0
    %289 = vmatprep.subr.bf16.mxu0 0
    %290 = vmatpush1.bf16.msra.mxu0 0
    %291 = vmatprep.subr.bf16.mxu0 0
    %292 = vmatpush1.bf16.msra.mxu0 0
    %293 = vmatprep.subr.bf16.mxu0 0
    %294 = vmatpush1.bf16.msra.mxu0 0
    %295 = vmatprep.subr.bf16.mxu0 0
    %296 = vmatpush1.bf16.msra.mxu0 0
    %297 = vmatprep.subr.bf16.mxu0 0
    %298 = vmatpush1.bf16.msra.mxu0 0
    %299 = vmatprep.subr.bf16.mxu0 0
    %300 = vmatpush1.bf16.msra.mxu0 0
    %301 = vmatprep.mubr.bf16.mxu0 0
    %302 = vmatmul.mubr.bf16.gmra.mrb[0].mxu0 %v264
    %v303 = vpop.f32.mrb[0].mxu0
    %v304 = vadd.f32 %v249, %v303
    %v305 = vpop.f32.mrb[0].mxu0
    %v306 = vpop.f32.mrb[0].mxu0
    %v307 = vadd.f32 %v249, %v306
    %v308 = vpop.f32.mrb[0].mxu0
    %309 = vmatprep.mubr.bf16.mxu0 0
    %310 = vmatmul.mubr.bf16.gmra.mrb[0].mxu0 %v267
    %v311 = vpop.f32.mrb[0].mxu0
    %v312 = vadd.f32 %v249, %v311
    %v313 = vpop.f32.mrb[0].mxu0
    %v314 = vpop.f32.mrb[0].mxu0
    %v315 = vadd.f32 %v249, %v314
    %v316 = vpop.f32.mrb[0].mxu0
    %317 = vdwg.mxu0
    %v318 = vmax.f32 %v304, 0.0
    %v319 = vmax.f32 %v307, 0.0
    %v320 = vmax.f32 %v312, 0.0
    %v321 = vmax.f32 %v315, 0.0
    %v322 = vld [vmem:[#allocation2 + $0x18] sm:$0xf]
    %v323 = vld [vmem:[%s2 + $0x2] sm:$0x1]
    %v324 = vpack.c.bf16 %v30, %v29
    %v325 = vpack.c.bf16 %v32, %v31
    %v326 = vlaneseq
    %v327 = vshrl.u32 %v326, 7
    %v328 = vsub.s32 0, %v327
    %v329 = vrot.slane %v323, %v328
    %v331 = vsel %vm128, %v324, 0
    %v334 = vsel %vm128, %v325, 0
    %vm336 = vcmask 1043456
    %v338 = vsel %vm336, %v322, 0
    %340 = vmatprep.subr.bf16.mxu0 0
    %341 = vmatpush1.bf16.msra.mxu0 %v338
    %342 = vmatprep.subr.bf16.mxu0 0
    %343 = vmatpush1.bf16.msra.mxu0 0
    %344 = vmatprep.subr.bf16.mxu0 0
    %345 = vmatpush1.bf16.msra.mxu0 0
    %346 = vmatprep.subr.bf16.mxu0 0
    %347 = vmatpush1.bf16.msra.mxu0 0
    %348 = vmatprep.subr.bf16.mxu0 0
    %349 = vmatpush1.bf16.msra.mxu0 0
    %350 = vmatprep.subr.bf16.mxu0 0
    %351 = vmatpush1.bf16.msra.mxu0 0
    %352 = vmatprep.subr.bf16.mxu0 0
    %353 = vmatpush1.bf16.msra.mxu0 0
    %354 = vmatprep.subr.bf16.mxu0 0
    %355 = vmatpush1.bf16.msra.mxu0 0
    %356 = vmatprep.subr.bf16.mxu0 0
    %357 = vmatpush1.bf16.msra.mxu0 0
    %358 = vmatprep.subr.bf16.mxu0 0
    %359 = vmatpush1.bf16.msra.mxu0 0
    %360 = vmatprep.subr.bf16.mxu0 0
    %361 = vmatpush1.bf16.msra.mxu0 0
    %362 = vmatprep.subr.bf16.mxu0 0
    %363 = vmatpush1.bf16.msra.mxu0 0
    %364 = vmatprep.subr.bf16.mxu0 0
    %365 = vmatpush1.bf16.msra.mxu0 0
    %366 = vmatprep.subr.bf16.mxu0 0
    %367 = vmatpush1.bf16.msra.mxu0 0
    %368 = vmatprep.subr.bf16.mxu0 0
    %369 = vmatpush1.bf16.msra.mxu0 0
    %370 = vmatprep.subr.bf16.mxu0 0
    %371 = vmatpush1.bf16.msra.mxu0 0
    %372 = vmatprep.mubr.bf16.mxu0 0
    %373 = vmatmul.mubr.bf16.gmra.mrb[0].mxu0 %v331
    %v374 = vpop.f32.mrb[0].mxu0
    %v375 = vadd.f32 %v329, %v374
    %v376 = vpop.f32.mrb[0].mxu0
    %v377 = vpop.f32.mrb[0].mxu0
    %v378 = vadd.f32 %v329, %v377
    %v379 = vpop.f32.mrb[0].mxu0
    %380 = vmatprep.mubr.bf16.mxu0 0
    %381 = vmatmul.mubr.bf16.gmra.mrb[0].mxu0 %v334
    %v382 = vpop.f32.mrb[0].mxu0
    %v383 = vadd.f32 %v329, %v382
    %v384 = vpop.f32.mrb[0].mxu0
    %v385 = vpop.f32.mrb[0].mxu0
    %v386 = vadd.f32 %v329, %v385
    %v387 = vpop.f32.mrb[0].mxu0
    %388 = vdwg.mxu0
    %v389 = vadd.f32 %v318, %v375
    %v390 = vadd.f32 %v319, %v378
    %v391 = vadd.f32 %v320, %v383
    %v392 = vadd.f32 %v321, %v386
    %v393 = vmax.f32 %v389, 0.0
    %v394 = vmax.f32 %v390, 0.0
    %v395 = vmax.f32 %v391, 0.0
    %v396 = vmax.f32 %v392, 0.0
    %v397 = vld [vmem:[%s2 + $0x3] sm:$0x1]
    %v398 = vrot.slane %v393, 6
    %v399 = vrot.slane %v394, 6
    %v400 = vrot.slane %v395, 6
    %v401 = vrot.slane %v396, 6
    %vm402 = vcmp.lt.s32.totalorder %v34, 2
    %v403 = vsel %vm402, %v400, %v401
    %v404 = vsel %vm402, %v399, %v400
    %v405 = vsel %vm402, %v398, %v399
    %v406 = vsel %vm402, %v401, %v398
    %vm407 = vcmp.lt.s32.totalorder %v82, 2
    %vm408 = vcmp.lt.s32.totalorder %v83, 2
    %vm409 = vcmp.lt.s32.totalorder %v84, 2
    %vm410 = vcmp.lt.s32.totalorder %v85, 2
    %v411 = vsel %vm407, 1, 0
    %v412 = vsel %vm408, 1, 0
    %v413 = vsel %vm409, 1, 0
    %v414 = vsel %vm410, 1, 0
    %vm415 = vcmp.eq.s32.totalorder %v411, 1
    %vm416 = vcmp.eq.s32.totalorder %v412, 1
    %vm417 = vcmp.eq.s32.totalorder %v413, 1
    %vm418 = vcmp.eq.s32.totalorder %v414, 1
    %v419 = vsel %vm415, 0.0, %v406
    %v420 = vsel %vm416, 0.0, %v405
    %v421 = vsel %vm417, 0.0, %v404
    %v422 = vsel %vm418, 0.0, %v403
    %427 = vrot.lane.b32.xlu0 %v393, 16
    %v428 = vpop.permute.xlu0 %427
    %429 = vrot.lane.b32.xlu0 %v394, 16
    %v430 = vpop.permute.xlu0 %429
    %431 = vrot.lane.b32.xlu0 %v395, 16
    %v432 = vpop.permute.xlu0 %431
    %433 = vrot.lane.b32.xlu0 %v396, 16
    %v434 = vpop.permute.xlu0 %433
    %v439 = vsel %vm147, %v419, %v428
    %v440 = vsel %vm147, %v420, %v430
    %v441 = vsel %vm147, %v421, %v432
    %v442 = vsel %vm147, %v422, %v434
    %v443 = vld [vmem:[#allocation2 + $0x20] sm:$0xf]
    %v444 = vld [vmem:[#allocation2 + $0x24] sm:$0xf]
    %v445 = vld [vmem:[#allocation2 + $0x28] sm:$0xf]
    %v446 = vld [vmem:[#allocation2 + $0x2c] sm:$0xf]
    %v447 = vpack.c.bf16 %v440, %v439
    %v448 = vpack.c.bf16 %v442, %v441
    %v449 = vlaneseq
    %v450 = vshrl.u32 %v449, 7
    %v451 = vsub.s32 0, %v450
    %v452 = vrot.slane %v397, %v451
    %v457 = vunpack.c.l.b16 %v443
    %v458 = vunpack.c.l.b16 %v444
    %v459 = vunpack.c.l.b16 %v445
    %v460 = vunpack.c.l.b16 %v446
    %v461 = vpack.c.b16 %v458, %v457
    %v462 = vpack.c.b16 %v460, %v459
    %v466 = vsel %vm262, %v447, 0
    %v469 = vsel %vm262, %v448, 0
    %471 = vmatprep.subr.bf16.mxu0 0
    %472 = vmatpush1.bf16.msra.mxu0 %v461
    %473 = vmatprep.subr.bf16.mxu0 0
    %474 = vmatpush1.bf16.msra.mxu0 %v462
    %475 = vmatprep.subr.bf16.mxu0 0
    %476 = vmatpush1.bf16.msra.mxu0 0
    %477 = vmatprep.subr.bf16.mxu0 0
    %478 = vmatpush1.bf16.msra.mxu0 0
    %479 = vmatprep.subr.bf16.mxu0 0
    %480 = vmatpush1.bf16.msra.mxu0 0
    %481 = vmatprep.subr.bf16.mxu0 0
    %482 = vmatpush1.bf16.msra.mxu0 0
    %483 = vmatprep.subr.bf16.mxu0 0
    %484 = vmatpush1.bf16.msra.mxu0 0
    %485 = vmatprep.subr.bf16.mxu0 0
    %486 = vmatpush1.bf16.msra.mxu0 0
    %487 = vmatprep.subr.bf16.mxu0 0
    %488 = vmatpush1.bf16.msra.mxu0 0
    %489 = vmatprep.subr.bf16.mxu0 0
    %490 = vmatpush1.bf16.msra.mxu0 0
    %491 = vmatprep.subr.bf16.mxu0 0
    %492 = vmatpush1.bf16.msra.mxu0 0
    %493 = vmatprep.subr.bf16.mxu0 0
    %494 = vmatpush1.bf16.msra.mxu0 0
    %495 = vmatprep.subr.bf16.mxu0 0
    %496 = vmatpush1.bf16.msra.mxu0 0
    %497 = vmatprep.subr.bf16.mxu0 0
    %498 = vmatpush1.bf16.msra.mxu0 0
    %499 = vmatprep.subr.bf16.mxu0 0
    %500 = vmatpush1.bf16.msra.mxu0 0
    %501 = vmatprep.subr.bf16.mxu0 0
    %502 = vmatpush1.bf16.msra.mxu0 0
    %503 = vmatprep.mubr.bf16.mxu0 0
    %504 = vmatmul.mubr.bf16.gmra.mrb[0].mxu0 %v466
    %v505 = vpop.f32.mrb[0].mxu0
    %v506 = vadd.f32 %v452, %v505
    %v507 = vpop.f32.mrb[0].mxu0
    %v508 = vpop.f32.mrb[0].mxu0
    %v509 = vadd.f32 %v452, %v508
    %v510 = vpop.f32.mrb[0].mxu0
    %511 = vmatprep.mubr.bf16.mxu0 0
    %512 = vmatmul.mubr.bf16.gmra.mrb[0].mxu0 %v469
    %v513 = vpop.f32.mrb[0].mxu0
    %v514 = vadd.f32 %v452, %v513
    %v515 = vpop.f32.mrb[0].mxu0
    %v516 = vpop.f32.mrb[0].mxu0
    %v517 = vadd.f32 %v452, %v516
    %v518 = vpop.f32.mrb[0].mxu0
    %519 = vdwg.mxu0
    %v520 = vmax.f32 %v506, 0.0
    %v521 = vmax.f32 %v509, 0.0
    %v522 = vmax.f32 %v514, 0.0
    %v523 = vmax.f32 %v517, 0.0
    %v524 = vld [vmem:[%s2 + $0x4] sm:$0x1]
    %v525 = vrot.slane %v520, 6
    %v526 = vrot.slane %v521, 6
    %v527 = vrot.slane %v522, 6
    %v528 = vrot.slane %v523, 6
    %v529 = vsel %vm402, %v527, %v528
    %v530 = vsel %vm402, %v526, %v527
    %v531 = vsel %vm402, %v525, %v526
    %v532 = vsel %vm402, %v528, %v525
    %v533 = vsel %vm415, 0.0, %v532
    %v534 = vsel %vm416, 0.0, %v531
    %v535 = vsel %vm417, 0.0, %v530
    %v536 = vsel %vm418, 0.0, %v529
    %541 = vrot.lane.b32.xlu0 %v520, 8
    %v542 = vpop.permute.xlu0 %541
    %543 = vrot.lane.b32.xlu0 %v521, 8
    %v544 = vpop.permute.xlu0 %543
    %545 = vrot.lane.b32.xlu0 %v522, 8
    %v546 = vpop.permute.xlu0 %545
    %547 = vrot.lane.b32.xlu0 %v523, 8
    %v548 = vpop.permute.xlu0 %547
    %v553 = vsel %vm128, %v533, %v542
    %v554 = vsel %vm128, %v534, %v544
    %v555 = vsel %vm128, %v535, %v546
    %v556 = vsel %vm128, %v536, %v548
    %v557 = vld [vmem:[#allocation2 + $0x30] sm:$0xf]
    %v558 = vld [vmem:[#allocation2 + $0x34] sm:$0xf]
    %v559 = vpack.c.bf16 %v554, %v553
    %v560 = vpack.c.bf16 %v556, %v555
    %v561 = vlaneseq
    %v562 = vshrl.u32 %v561, 7
    %v563 = vsub.s32 0, %v562
    %v564 = vrot.slane %v524, %v563
    %v567 = vunpack.c.l.b16 %v557
    %v568 = vunpack.c.l.b16 %v558
    %v569 = vpack.c.b16 %v568, %v567
    %v572 = vsel %vm147, %v559, 0
    %v575 = vsel %vm147, %v560, 0
    %577 = vmatprep.subr.bf16.mxu0 0
    %578 = vmatpush1.bf16.msra.mxu0 %v569
    %579 = vmatprep.subr.bf16.mxu0 0
    %580 = vmatpush1.bf16.msra.mxu0 0
    %581 = vmatprep.subr.bf16.mxu0 0
    %582 = vmatpush1.bf16.msra.mxu0 0
    %583 = vmatprep.subr.bf16.mxu0 0
    %584 = vmatpush1.bf16.msra.mxu0 0
    %585 = vmatprep.subr.bf16.mxu0 0
    %586 = vmatpush1.bf16.msra.mxu0 0
    %587 = vmatprep.subr.bf16.mxu0 0
    %588 = vmatpush1.bf16.msra.mxu0 0
    %589 = vmatprep.subr.bf16.mxu0 0
    %590 = vmatpush1.bf16.msra.mxu0 0
    %591 = vmatprep.subr.bf16.mxu0 0
    %592 = vmatpush1.bf16.msra.mxu0 0
    %593 = vmatprep.subr.bf16.mxu0 0
    %594 = vmatpush1.bf16.msra.mxu0 0
    %595 = vmatprep.subr.bf16.mxu0 0
    %596 = vmatpush1.bf16.msra.mxu0 0
    %597 = vmatprep.subr.bf16.mxu0 0
    %598 = vmatpush1.bf16.msra.mxu0 0
    %599 = vmatprep.subr.bf16.mxu0 0
    %600 = vmatpush1.bf16.msra.mxu0 0
    %601 = vmatprep.subr.bf16.mxu0 0
    %602 = vmatpush1.bf16.msra.mxu0 0
    %603 = vmatprep.subr.bf16.mxu0 0
    %604 = vmatpush1.bf16.msra.mxu0 0
    %605 = vmatprep.subr.bf16.mxu0 0
    %606 = vmatpush1.bf16.msra.mxu0 0
    %607 = vmatprep.subr.bf16.mxu0 0
    %608 = vmatpush1.bf16.msra.mxu0 0
    %609 = vmatprep.mubr.bf16.mxu0 0
    %610 = vmatmul.mubr.bf16.gmra.mrb[0].mxu0 %v572
    %v611 = vpop.f32.mrb[0].mxu0
    %v612 = vadd.f32 %v564, %v611
    %v613 = vpop.f32.mrb[0].mxu0
    %v614 = vpop.f32.mrb[0].mxu0
    %v615 = vadd.f32 %v564, %v614
    %v616 = vpop.f32.mrb[0].mxu0
    %617 = vmatprep.mubr.bf16.mxu0 0
    %618 = vmatmul.mubr.bf16.gmra.mrb[0].mxu0 %v575
    %v619 = vpop.f32.mrb[0].mxu0
    %v620 = vadd.f32 %v564, %v619
    %v621 = vpop.f32.mrb[0].mxu0
    %v622 = vpop.f32.mrb[0].mxu0
    %v623 = vadd.f32 %v564, %v622
    %v624 = vpop.f32.mrb[0].mxu0
    %625 = vdwg.mxu0
    %v626 = vmax.f32 %v612, 0.0
    %v627 = vmax.f32 %v615, 0.0
    %v628 = vmax.f32 %v620, 0.0
    %v629 = vmax.f32 %v623, 0.0
    %v630 = vld [vmem:[#allocation2 + $0x38] sm:$0xf]
    %v631 = vld [vmem:[#allocation2 + $0x3c] sm:$0xf]
    %v632 = vld [vmem:[%s2 + $0x5] sm:$0x1]
    %v633 = vpack.c.bf16 %v394, %v393
    %v634 = vpack.c.bf16 %v396, %v395
    %v635 = vlaneseq
    %v636 = vshrl.u32 %v635, 7
    %v637 = vsub.s32 0, %v636
    %v638 = vrot.slane %v632, %v637
    %v641 = vunpack.c.l.b16 %v630
    %v642 = vunpack.c.l.b16 %v631
    %v643 = vpack.c.b16 %v642, %v641
    %v646 = vsel %vm147, %v633, 0
    %v649 = vsel %vm147, %v634, 0
    %651 = vmatprep.subr.bf16.mxu0 0
    %652 = vmatpush1.bf16.msra.mxu0 %v643
    %653 = vmatprep.subr.bf16.mxu0 0
    %654 = vmatpush1.bf16.msra.mxu0 0
    %655 = vmatprep.subr.bf16.mxu0 0
    %656 = vmatpush1.bf16.msra.mxu0 0
    %657 = vmatprep.subr.bf16.mxu0 0
    %658 = vmatpush1.bf16.msra.mxu0 0
    %659 = vmatprep.subr.bf16.mxu0 0
    %660 = vmatpush1.bf16.msra.mxu0 0
    %661 = vmatprep.subr.bf16.mxu0 0
    %662 = vmatpush1.bf16.msra.mxu0 0
    %663 = vmatprep.subr.bf16.mxu0 0
    %664 = vmatpush1.bf16.msra.mxu0 0
    %665 = vmatprep.subr.bf16.mxu0 0
    %666 = vmatpush1.bf16.msra.mxu0 0
    %667 = vmatprep.subr.bf16.mxu0 0
    %668 = vmatpush1.bf16.msra.mxu0 0
    %669 = vmatprep.subr.bf16.mxu0 0
    %670 = vmatpush1.bf16.msra.mxu0 0
    %671 = vmatprep.subr.bf16.mxu0 0
    %672 = vmatpush1.bf16.msra.mxu0 0
    %673 = vmatprep.subr.bf16.mxu0 0
    %674 = vmatpush1.bf16.msra.mxu0 0
    %675 = vmatprep.subr.bf16.mxu0 0
    %676 = vmatpush1.bf16.msra.mxu0 0
    %677 = vmatprep.subr.bf16.mxu0 0
    %678 = vmatpush1.bf16.msra.mxu0 0
    %679 = vmatprep.subr.bf16.mxu0 0
    %680 = vmatpush1.bf16.msra.mxu0 0
    %681 = vmatprep.subr.bf16.mxu0 0
    %682 = vmatpush1.bf16.msra.mxu0 0
    %683 = vmatprep.mubr.bf16.mxu0 0
    %684 = vmatmul.mubr.bf16.gmra.mrb[0].mxu0 %v646
    %v685 = vpop.f32.mrb[0].mxu0
    %v686 = vadd.f32 %v638, %v685
    %v687 = vpop.f32.mrb[0].mxu0
    %v688 = vpop.f32.mrb[0].mxu0
    %v689 = vadd.f32 %v638, %v688
    %v690 = vpop.f32.mrb[0].mxu0
    %691 = vmatprep.mubr.bf16.mxu0 0
    %692 = vmatmul.mubr.bf16.gmra.mrb[0].mxu0 %v649
    %v693 = vpop.f32.mrb[0].mxu0
    %v694 = vadd.f32 %v638, %v693
    %v695 = vpop.f32.mrb[0].mxu0
    %v696 = vpop.f32.mrb[0].mxu0
    %v697 = vadd.f32 %v638, %v696
    %v698 = vpop.f32.mrb[0].mxu0
    %699 = vdwg.mxu0
    %v700 = vadd.f32 %v626, %v686
    %v701 = vadd.f32 %v627, %v689
    %v702 = vadd.f32 %v628, %v694
    %v703 = vadd.f32 %v629, %v697
    %v704 = vmax.f32 %v700, 0.0
    %v705 = vmax.f32 %v701, 0.0
    %v706 = vmax.f32 %v702, 0.0
    %v707 = vmax.f32 %v703, 0.0
    %v708 = vld [vmem:[%s2 + $0x6] sm:$0x1]
    %v709 = vrot.slane %v704, 4
    %v710 = vrot.slane %v705, 4
    %v711 = vrot.slane %v706, 4
    %v712 = vrot.slane %v707, 4
    %vm713 = vcmp.lt.s32.totalorder %v34, 4
    %v714 = vsel %vm713, %v711, %v712
    %v715 = vsel %vm713, %v710, %v711
    %v716 = vsel %vm713, %v709, %v710
    %v717 = vsel %vm713, %v712, %v709
    %vm718 = vcmp.lt.s32.totalorder %v82, 4
    %vm719 = vcmp.lt.s32.totalorder %v83, 4
    %vm720 = vcmp.lt.s32.totalorder %v84, 4
    %vm721 = vcmp.lt.s32.totalorder %v85, 4
    %v722 = vsel %vm718, 1, 0
    %v723 = vsel %vm719, 1, 0
    %v724 = vsel %vm720, 1, 0
    %v725 = vsel %vm721, 1, 0
    %vm726 = vcmp.eq.s32.totalorder %v722, 1
    %vm727 = vcmp.eq.s32.totalorder %v723, 1
    %vm728 = vcmp.eq.s32.totalorder %v724, 1
    %vm729 = vcmp.eq.s32.totalorder %v725, 1
    %v730 = vsel %vm726, 0.0, %v717
    %v731 = vsel %vm727, 0.0, %v716
    %v732 = vsel %vm728, 0.0, %v715
    %v733 = vsel %vm729, 0.0, %v714
    %738 = vrot.lane.b32.xlu0 %v704, 8
    %v739 = vpop.permute.xlu0 %738
    %740 = vrot.lane.b32.xlu0 %v705, 8
    %v741 = vpop.permute.xlu0 %740
    %742 = vrot.lane.b32.xlu0 %v706, 8
    %v743 = vpop.permute.xlu0 %742
    %744 = vrot.lane.b32.xlu0 %v707, 8
    %v745 = vpop.permute.xlu0 %744
    %v750 = vsel %vm128, %v730, %v739
    %v751 = vsel %vm128, %v731, %v741
    %v752 = vsel %vm128, %v732, %v743
    %v753 = vsel %vm128, %v733, %v745
    %v754 = vld [vmem:[#allocation2 + $0x40] sm:$0xf]
    %v755 = vld [vmem:[#allocation2 + $0x44] sm:$0xf]
    %v756 = vpack.c.bf16 %v751, %v750
    %v757 = vpack.c.bf16 %v753, %v752
    %v758 = vlaneseq
    %v759 = vshrl.u32 %v758, 7
    %v760 = vsub.s32 0, %v759
    %v761 = vrot.slane %v708, %v760
    %v764 = vunpack.c.l.b16 %v754
    %v765 = vunpack.c.l.b16 %v755
    %v766 = vpack.c.b16 %v765, %v764
    %v769 = vsel %vm147, %v756, 0
    %v772 = vsel %vm147, %v757, 0
    %774 = vmatprep.subr.bf16.mxu0 0
    %775 = vmatpush1.bf16.msra.mxu0 %v766
    %776 = vmatprep.subr.bf16.mxu0 0
    %777 = vmatpush1.bf16.msra.mxu0 0
    %778 = vmatprep.subr.bf16.mxu0 0
    %779 = vmatpush1.bf16.msra.mxu0 0
    %780 = vmatprep.subr.bf16.mxu0 0
    %781 = vmatpush1.bf16.msra.mxu0 0
    %782 = vmatprep.subr.bf16.mxu0 0
    %783 = vmatpush1.bf16.msra.mxu0 0
    %784 = vmatprep.subr.bf16.mxu0 0
    %785 = vmatpush1.bf16.msra.mxu0 0
    %786 = vmatprep.subr.bf16.mxu0 0
    %787 = vmatpush1.bf16.msra.mxu0 0
    %788 = vmatprep.subr.bf16.mxu0 0
    %789 = vmatpush1.bf16.msra.mxu0 0
    %790 = vmatprep.subr.bf16.mxu0 0
    %791 = vmatpush1.bf16.msra.mxu0 0
    %792 = vmatprep.subr.bf16.mxu0 0
    %793 = vmatpush1.bf16.msra.mxu0 0
    %794 = vmatprep.subr.bf16.mxu0 0
    %795 = vmatpush1.bf16.msra.mxu0 0
    %796 = vmatprep.subr.bf16.mxu0 0
    %797 = vmatpush1.bf16.msra.mxu0 0
    %798 = vmatprep.subr.bf16.mxu0 0
    %799 = vmatpush1.bf16.msra.mxu0 0
    %800 = vmatprep.subr.bf16.mxu0 0
    %801 = vmatpush1.bf16.msra.mxu0 0
    %802 = vmatprep.subr.bf16.mxu0 0
    %803 = vmatpush1.bf16.msra.mxu0 0
    %804 = vmatprep.subr.bf16.mxu0 0
    %805 = vmatpush1.bf16.msra.mxu0 0
    %806 = vmatprep.mubr.bf16.mxu0 0
    %807 = vmatmul.mubr.bf16.gmra.mrb[0].mxu0 %v769
    %v808 = vpop.f32.mrb[0].mxu0
    %v809 = vadd.f32 %v761, %v808
    %v810 = vpop.f32.mrb[0].mxu0
    %v811 = vpop.f32.mrb[0].mxu0
    %v812 = vadd.f32 %v761, %v811
    %v813 = vpop.f32.mrb[0].mxu0
    %814 = vmatprep.mubr.bf16.mxu0 0
    %815 = vmatmul.mubr.bf16.gmra.mrb[0].mxu0 %v772
    %v816 = vpop.f32.mrb[0].mxu0
    %v817 = vadd.f32 %v761, %v816
    %v818 = vpop.f32.mrb[0].mxu0
    %v819 = vpop.f32.mrb[0].mxu0
    %v820 = vadd.f32 %v761, %v819
    %v821 = vpop.f32.mrb[0].mxu0
    %822 = vdwg.mxu0
    %v823 = vmax.f32 %v809, 0.0
    %v824 = vmax.f32 %v812, 0.0
    %v825 = vmax.f32 %v817, 0.0
    %v826 = vmax.f32 %v820, 0.0
    %v827 = vld [vmem:[%s2 + $0x7] sm:$0x1]
    %v828 = vrot.slane %v823, 4
    %v829 = vrot.slane %v824, 4
    %v830 = vrot.slane %v825, 4
    %v831 = vrot.slane %v826, 4
    %v832 = vsel %vm713, %v830, %v831
    %v833 = vsel %vm713, %v829, %v830
    %v834 = vsel %vm713, %v828, %v829
    %v835 = vsel %vm713, %v831, %v828
    %v836 = vsel %vm726, 0.0, %v835
    %v837 = vsel %vm727, 0.0, %v834
    %v838 = vsel %vm728, 0.0, %v833
    %v839 = vsel %vm729, 0.0, %v832
    %844 = vrot.lane.b32.xlu0 %v823, 8
    %v845 = vpop.permute.xlu0 %844
    %846 = vrot.lane.b32.xlu0 %v824, 8
    %v847 = vpop.permute.xlu0 %846
    %848 = vrot.lane.b32.xlu0 %v825, 8
    %v849 = vpop.permute.xlu0 %848
    %850 = vrot.lane.b32.xlu0 %v826, 8
    %v851 = vpop.permute.xlu0 %850
    %v856 = vsel %vm128, %v836, %v845
    %v857 = vsel %vm128, %v837, %v847
    %v858 = vsel %vm128, %v838, %v849
    %v859 = vsel %vm128, %v839, %v851
    %v860 = vld [vmem:[#allocation2 + $0x48] sm:$0xf]
    %v861 = vld [vmem:[#allocation2 + $0x4c] sm:$0xf]
    %v862 = vpack.c.bf16 %v857, %v856
    %v863 = vpack.c.bf16 %v859, %v858
    %v864 = vlaneseq
    %v865 = vshrl.u32 %v864, 7
    %v866 = vsub.s32 0, %v865
    %v867 = vrot.slane %v827, %v866
    %v870 = vunpack.c.l.b16 %v860
    %v871 = vunpack.c.l.b16 %v861
    %v872 = vpack.c.b16 %v871, %v870
    %v875 = vsel %vm147, %v862, 0
    %v878 = vsel %vm147, %v863, 0
    %880 = vmatprep.subr.bf16.mxu0 0
    %881 = vmatpush1.bf16.msra.mxu0 %v872
    %882 = vmatprep.subr.bf16.mxu0 0
    %883 = vmatpush1.bf16.msra.mxu0 0
    %884 = vmatprep.subr.bf16.mxu0 0
    %885 = vmatpush1.bf16.msra.mxu0 0
    %886 = vmatprep.subr.bf16.mxu0 0
    %887 = vmatpush1.bf16.msra.mxu0 0
    %888 = vmatprep.subr.bf16.mxu0 0
    %889 = vmatpush1.bf16.msra.mxu0 0
    %890 = vmatprep.subr.bf16.mxu0 0
    %891 = vmatpush1.bf16.msra.mxu0 0
    %892 = vmatprep.subr.bf16.mxu0 0
    %893 = vmatpush1.bf16.msra.mxu0 0
    %894 = vmatprep.subr.bf16.mxu0 0
    %895 = vmatpush1.bf16.msra.mxu0 0
    %896 = vmatprep.subr.bf16.mxu0 0
    %897 = vmatpush1.bf16.msra.mxu0 0
    %898 = vmatprep.subr.bf16.mxu0 0
    %899 = vmatpush1.bf16.msra.mxu0 0
    %900 = vmatprep.subr.bf16.mxu0 0
    %901 = vmatpush1.bf16.msra.mxu0 0
    %902 = vmatprep.subr.bf16.mxu0 0
    %903 = vmatpush1.bf16.msra.mxu0 0
    %904 = vmatprep.subr.bf16.mxu0 0
    %905 = vmatpush1.bf16.msra.mxu0 0
    %906 = vmatprep.subr.bf16.mxu0 0
    %907 = vmatpush1.bf16.msra.mxu0 0
    %908 = vmatprep.subr.bf16.mxu0 0
    %909 = vmatpush1.bf16.msra.mxu0 0
    %910 = vmatprep.subr.bf16.mxu0 0
    %911 = vmatpush1.bf16.msra.mxu0 0
    %912 = vmatprep.mubr.bf16.mxu0 0
    %913 = vmatmul.mubr.bf16.gmra.mrb[0].mxu0 %v875
    %v914 = vpop.f32.mrb[0].mxu0
    %v915 = vpop.f32.mrb[0].mxu0
    %v916 = vpop.f32.mrb[0].mxu0
    %v917 = vadd.f32 %v867, %v916
    %v918 = vpop.f32.mrb[0].mxu0
    %919 = vmatprep.mubr.bf16.mxu0 0
    %920 = vmatmul.mubr.bf16.gmra.mrb[0].mxu0 %v878
    %v921 = vpop.f32.mrb[0].mxu0
    %v922 = vpop.f32.mrb[0].mxu0
    %v923 = vpop.f32.mrb[0].mxu0
    %v924 = vadd.f32 %v867, %v923
    %v925 = vpop.f32.mrb[0].mxu0
    %926 = vdwg.mxu0
    %v927 = vmax.f32 %v917, 0.0
    %v928 = vmax.f32 %v924, 0.0
    %v929 = vadd.f32 %v927, %v705
    %v930 = vadd.f32 %v928, %v707
    %v931 = vmax.f32 %v929, 0.0
    %v932 = vmax.f32 %v930, 0.0
    %v933 = vld [vmem:[#allocation2 + $0x50] sm:$0xf]
    %v934 = vld [vmem:[%s2 + $0x8] sm:$0x1]
    %v935 = vpack.c.bf16 %v931, %v931
    %v936 = vpack.c.bf16 %v932, %v932
    %v937 = vlaneseq
    %v938 = vshrl.u32 %v937, 7
    %v939 = vsub.s32 0, %v938
    %v940 = vrot.slane %v934, %v939
    %v943 = vunpack.c.l.b16 %v935
    %v944 = vunpack.c.l.b16 %v936
    %v945 = vrot.slane %v943, 7
    %v946 = vrot.slane %v944, 6
    %vm947 = vcmask 1041409
    %v948 = vsel %vm947, %v946, %v945
    %v949 = vpack.c.b16 %v948, %v948
    %v951 = vsel %vm128, %v949, 0
    %v954 = vsel %vm336, %v933, 0
    %956 = vmatprep.subr.bf16.mxu0 0
    %957 = vmatpush1.bf16.msra.mxu0 %v954
    %958 = vmatprep.subr.bf16.mxu0 0
    %959 = vmatpush1.bf16.msra.mxu0 0
    %960 = vmatprep.subr.bf16.mxu0 0
    %961 = vmatpush1.bf16.msra.mxu0 0
    %962 = vmatprep.subr.bf16.mxu0 0
    %963 = vmatpush1.bf16.msra.mxu0 0
    %964 = vmatprep.subr.bf16.mxu0 0
    %965 = vmatpush1.bf16.msra.mxu0 0
    %966 = vmatprep.subr.bf16.mxu0 0
    %967 = vmatpush1.bf16.msra.mxu0 0
    %968 = vmatprep.subr.bf16.mxu0 0
    %969 = vmatpush1.bf16.msra.mxu0 0
    %970 = vmatprep.subr.bf16.mxu0 0
    %971 = vmatpush1.bf16.msra.mxu0 0
    %972 = vmatprep.subr.bf16.mxu0 0
    %973 = vmatpush1.bf16.msra.mxu0 0
    %974 = vmatprep.subr.bf16.mxu0 0
    %975 = vmatpush1.bf16.msra.mxu0 0
    %976 = vmatprep.subr.bf16.mxu0 0
    %977 = vmatpush1.bf16.msra.mxu0 0
    %978 = vmatprep.subr.bf16.mxu0 0
    %979 = vmatpush1.bf16.msra.mxu0 0
    %980 = vmatprep.subr.bf16.mxu0 0
    %981 = vmatpush1.bf16.msra.mxu0 0
    %982 = vmatprep.subr.bf16.mxu0 0
    %983 = vmatpush1.bf16.msra.mxu0 0
    %984 = vmatprep.subr.bf16.mxu0 0
    %985 = vmatpush1.bf16.msra.mxu0 0
    %986 = vmatprep.subr.bf16.mxu0 0
    %987 = vmatpush1.bf16.msra.mxu0 0
    %988 = vmatprep.mubr.bf16.mxu0 0
    %989 = vmatmul.mubr.bf16.gmra.mrb[0].mxu0 %v951
    %v990 = vpop.f32.mrb[0].mxu0
    %v991 = vadd.f32 %v940, %v990
    %v992 = vpop.f32.mrb[0].mxu0
    %v993 = vpop.f32.mrb[0].mxu0
    %v994 = vpop.f32.mrb[0].mxu0
    %995 = vdwg.mxu0
    %vm996 = vcmask 33792
    %997 = vst.msk [vmem:[%s3] sm:$0x3] %vm996, %v991
    // Predicated region
    $region18: #{fwd.1} parent=1 // pred_check
      _
    $region19: #{fwd.1} parent=1 // pred_check_branch
      %999 = sbr.rel (0) target = $region21
    $region20: #{fwd.1} parent=1 // pred_region
      _
    $region21: #{fwd.1} parent=1 // pred_fallthru
      _
    // Predicated region
    $region22: #{fwd.1} parent=1 // pred_check
      _
    $region23: #{fwd.1} parent=1 // pred_check_branch
      %1001 = sbr.rel (0) target = $region25
    $region24: #{fwd.1} parent=1 // pred_region
      _
    $region25: #{fwd.1} parent=1 // pred_fallthru
      _
    %1002 = vsyncpa [#allocation3], 1

</llo_original>
